<compile_context>
chip_gen: v7x
topology: tpu7x:2x2x1
jax: 0.10.0
libtpu: 0.0.40
codegen_flags: <defaults>
</compile_context>

<pallas_src>
import functools

import jax
import jax.numpy as jnp
from jax.experimental import pallas as pl
from jax.experimental.pallas import tpu as pltpu


def _round_up(a, b):
    return ((a + b - 1) // b) * b


def _cdiv(a, b):
    return -(-a // b)


# ----------------------------------------------------------------------------
# Phase 1 kernel: per-split partial X^T X accumulation (resident (1, d, d))
# ----------------------------------------------------------------------------
def _make_cov_kernel(tn, tiles_per_split, n_rows, needs_mask):
    def kernel(x_ref, cov_ref):
        @pl.when(pl.program_id(1) == 0)
        def _():
            cov_ref[...] = jnp.zeros_like(cov_ref)

        x = x_ref[...]
        if needs_mask:
            # Ragged last tile (and clamped duplicate tiles of an uneven split)
            # are zeroed before the MXU: rows with global index >= n_rows
            # contribute nothing to X^T X.
            t = pl.program_id(0) * tiles_per_split + pl.program_id(1)
            rows = jax.lax.broadcasted_iota(jnp.int32, x.shape, 0) + t * tn
            x = jnp.where(rows < n_rows, x, jnp.zeros_like(x))

        # Contract over rows without an explicit transpose (MXU-friendly).
        # TODO(synk): if the Mosaic dump shows a per-tile vxpose dominating for
        # very small d, shrink tn for phase 1 only.
        acc = jax.lax.dot_general(
            x, x,
            dimension_numbers=(((0,), (0,)), ((), ())),
            preferred_element_type=jnp.float32,
        )
        cov_ref[0, :, :] = cov_ref[0, :, :] + acc

    return kernel


# ----------------------------------------------------------------------------
# Phase 2 kernel: stream row tiles; diag term folded into M -> matmul + add
# ----------------------------------------------------------------------------
def _grad_stream_kernel(x_ref, g_ref, m_ref, o_ref):
    cov_term = jnp.dot(x_ref[...], m_ref[...], preferred_element_type=jnp.float32)
    o_ref[...] = (g_ref[...].astype(jnp.float32) + cov_term).astype(o_ref.dtype)


# ----------------------------------------------------------------------------
# Tile selection: target ~2 MiB streamed tiles, fit VMEM working set
# ----------------------------------------------------------------------------
def _choose_row_tile(N, d, itemsize, row_tile=None):
    if row_tile is not None:
        tn = min(int(row_tile), N)
        if tn < N:
            tn = max(8, (tn // 8) * 8)
        return tn
    bytes_per_row = max(d * itemsize, 1)
    # ~2 MiB per streamed input tile (amortizes ~0.35us/grid-step overhead),
    # capped for VMEM; small d naturally gets much larger tn.
    tn = _round_up(max(8, (2 * 1024 * 1024) // bytes_per_row), 8)
    tn = min(tn, 4096)
    # Phase-2 working set: x/g/out double-buffered + resident M + f32 temps.
    budget = 40 * 1024 * 1024
    resident = 2 * d * d * max(itemsize, 4)
    avail = max(budget - resident, 2 * 1024 * 1024)
    tn_cap = max(8, (avail // (6 * bytes_per_row + 2 * d * 4)) // 8 * 8)
    tn = max(8, min(tn, tn_cap))
    if tn >= N:
        return N  # single full-extent block: always a legal block shape
    return tn


# ----------------------------------------------------------------------------
# Backward wrapper: two pallas_calls + tiny (d, d) post-processing in JAX
# ----------------------------------------------------------------------------
def _vcreg_backward_pallas(x, g, var, cov, epsilon, row_tile=None):
    n, s, d = x.shape
    N = n * s
    # TODO(synk): N == 1 (denom 0) and d == 1 (d*(d-1) == 0) divide by zero,
    # exactly as the PyTorch reference does; not guarded here.
    denom = float(N - 1)
    itemsize = jnp.dtype(x.dtype).itemsize

    x2 = x.reshape(N, d)
    g2 = g.reshape(N, d)

    tn = _choose_row_tile(N, d, itemsize, row_tile)
    num_tiles = _cdiv(N, tn)
    n_splits = 2 if num_tiles >= 4 else 1   # keep both TensorCores busy on v7x
    tiles_per_split = _cdiv(num_tiles, n_splits)
    needs_mask = (n_splits * tiles_per_split * tn) != N

    # Scoped-VMEM limits sized from the real working set (with headroom); keeps
    # tiles large on v5e/v6e while staying inside v7x's 64 MiB physical VMEM.
    mib = 1024 * 1024
    p1_need = 2 * tn * d * itemsize + 2 * d * d * 4 + 2 * mib
    p2_need = 6 * tn * d * itemsize + 2 * d * d * itemsize + 2 * tn * d * 4 + 2 * mib
    p1_limit = int(min(100 * mib, max(32 * mib, (3 * p1_need) // 2)))
    p2_limit = int(min(100 * mib, max(32 * mib, (3 * p2_need) // 2)))

    # ---- phase 1: partial covariance accumulation -------------------------
    def x_map(sidx, tidx):
        t = sidx * tiles_per_split + tidx
        if needs_mask:
            t = jnp.minimum(t, num_tiles - 1)  # never request an OOB block
        return (t, 0)

    cov_partial = pl.pallas_call(
        _make_cov_kernel(tn, tiles_per_split, N, needs_mask),
        out_shape=jax.ShapeDtypeStruct((n_splits, d, d), jnp.float32),
        grid=(n_splits, tiles_per_split),
        in_specs=[pl.BlockSpec((tn, d), x_map)],
        out_specs=pl.BlockSpec((1, d, d), lambda sidx, tidx: (sidx, 0, 0)),
        compiler_params=pltpu.CompilerParams(
            dimension_semantics=("parallel", "arbitrary"),
            vmem_limit_bytes=p1_limit,
        ),
        cost_estimate=pl.CostEstimate(
            flops=2 * N * d * d,
            transcendentals=0,
            bytes_accessed=N * d * itemsize + n_splits * d * d * 4,
        ),
    )(x2)
    cov_sum = jnp.sum(cov_partial, axis=0) if n_splits > 1 else cov_partial[0]

    # ---- phase boundary: tiny (d,)/(d,d) math, hoisted out of the stream ---
    cov_mat = cov_sum / denom
    diag_v = jax.lax.rsqrt(jnp.diagonal(cov_mat) + epsilon)
    diag_v = jnp.where(diag_v > 1.0, diag_v, 0.0)          # F.threshold(., 1.0, 0.0)
    coef_var = -var / (d * denom)
    coef_cov = 4.0 * cov / (d * (d - 1))
    eye = jnp.eye(d, dtype=bool)
    # Fold the variance (diagonal) term into the covariance operand so phase 2
    # is a single matmul + add; cast once here (no per-tile convert).  Note:
    # for bf16 inputs this quantizes the operand before the MXU (acceptable,
    # verified against the f32 reference for f32 inputs below).
    m_op = jnp.where(eye, coef_var * diag_v, coef_cov * cov_mat).astype(x.dtype)

    # ---- phase 2: grad streaming (one matmul + one add per tile) ----------
    grad2 = pl.pallas_call(
        _grad_stream_kernel,
        out_shape=jax.ShapeDtypeStruct((N, d), g.dtype),
        grid=(num_tiles,),
        in_specs=[
            pl.BlockSpec((tn, d), lambda i: (i, 0)),   # x tile
            pl.BlockSpec((tn, d), lambda i: (i, 0)),   # g tile
            pl.BlockSpec((d, d), lambda i: (0, 0)),    # M (resident, x.dtype)
        ],
        out_specs=pl.BlockSpec((tn, d), lambda i: (i, 0)),
        compiler_params=pltpu.CompilerParams(
            dimension_semantics=("parallel",),
            vmem_limit_bytes=p2_limit,
        ),
        cost_estimate=pl.CostEstimate(
            flops=2 * N * d * d + N * d,
            transcendentals=0,
            bytes_accessed=3 * N * d * itemsize + d * d * itemsize,
        ),
    )(x2, g2, m_op)

    return grad2.reshape(n, s, d)


# ----------------------------------------------------------------------------
# Module-equivalent wrapper with custom VJP (mirrors _VCReg.apply)
# ----------------------------------------------------------------------------
@functools.partial(jax.custom_vjp, nondiff_argnums=(1, 2, 3))
def vcreg(x, var=0.16, cov=0.01, epsilon=1e-5):
    # Forward is identity; `input.clone()` semantics are free (immutable arrays).
    return x


def _vcreg_fwd(x, var, cov, epsilon):
    return x, x


def _vcreg_bwd(var, cov, epsilon, residual_x, g):
    return (_vcreg_backward_pallas(residual_x, g, var, cov, epsilon),)


vcreg.defvjp(_vcreg_fwd, _vcreg_bwd)


class VCReg:
    """JAX/Pallas equivalent of the PyTorch VCReg module."""

    def __init__(self, var=0.16, cov=0.01, epsilon=1e-5):
        self.var = var
        self.cov = cov
        self.epsilon = epsilon

    def __call__(self, x):
        return vcreg(x, self.var, self.cov, self.epsilon)


# ----------------------------------------------------------------------------
# Pure-JAX reference of _VCReg.backward (correctness checking only)
# ----------------------------------------------------------------------------
def _reference_grad(x, g, var, cov, epsilon):
    n, s, d = x.shape
    N = n * s
    X = x.reshape(N, d).astype(jnp.float32)
    G = g.reshape(N, d).astype(jnp.float32)
    C = (X.T @ X) / (N - 1)
    diag = jax.lax.rsqrt(jnp.diagonal(C) + epsilon)
    diag = jnp.where(diag > 1.0, diag, 0.0)
    std_grad = diag * X
    Cz = jnp.where(jnp.eye(d, dtype=bool), 0.0, C)
    cov_grad = X @ Cz
    grad = G - var / (d * (N - 1)) * std_grad + 4.0 * cov / (d * (d - 1)) * cov_grad
    return grad.reshape(n, s, d).astype(x.dtype)


if __name__ == "__main__":
    key = jax.random.PRNGKey(0)
    # (n, seq_len, d) as implied by the backward: n=2, seq_len=8, d=32.
    x = jax.random.normal(key, (2, 8, 32), dtype=jnp.float32)

    module = VCReg()

    # Forward: identity.
    y = jax.block_until_ready(module(x))
    assert y.shape == x.shape and y.dtype == x.dtype
    assert bool(jnp.allclose(y, x)), "forward is not identity"

    # Backward through jax.grad exercises both Pallas kernels (single tile).
    grad_fn = jax.grad(lambda v: jnp.sum(module(v)))
    gx = jax.block_until_ready(grad_fn(x))
    assert gx.shape == x.shape
    ref = _reference_grad(x, jnp.ones_like(x), 0.16, 0.01, 1e-5)
    assert bool(jnp.allclose(gx, ref, atol=1e-5, rtol=1e-5)), "backward mismatch"

    # Multi-tile + split-accumulation path (grid (2, 2) x (4,)), no padding.
    key2 = jax.random.PRNGKey(1)
    xb = jax.random.normal(key2, (2, 16, 32), dtype=jnp.float32)
    gb = jax.random.normal(jax.random.PRNGKey(2), (2, 16, 32), dtype=jnp.float32)
    got = jax.block_until_ready(
        _vcreg_backward_pallas(xb, gb, 0.16, 0.01, 1e-5, row_tile=8)
    )
    want = _reference_grad(xb, gb, 0.16, 0.01, 1e-5)
    assert bool(jnp.allclose(got, want, atol=1e-5, rtol=1e-5)), "tiled backward mismatch"

    print("KERNEL_OK")
</pallas_src>

<mosaic_0001>
module attributes {stable_mosaic.version = 11 : i64} {
  func.func @kernel(%arg0: i32, %arg1: i32, %arg2: memref<16x32xf32, #tpu.memory_space<vmem>>, %arg3: memref<1x32x32xf32, #tpu.memory_space<vmem>>) attributes {dimension_semantics = [#tpu.dimension_semantics<parallel>, #tpu.dimension_semantics<arbitrary>], iteration_bounds = array<i64: 1, 1>, scalar_prefetch = 0 : i64, scratch_operands = 0 : i64, tpu.core_type = #tpu.core_type<tc>, window_params = [{transform_indices = @transform_0, window_bounds = array<i64: 16, 32>}, {transform_indices = @transform_1, window_bounds = array<i64: 1, 32, 32>}]} {
    %c0_i32 = arith.constant 0 : i32
    %0 = arith.cmpi eq, %arg1, %c0_i32 : i32
    %1 = arith.extui %0 : i1 to i32
    %c0_i32_0 = arith.constant 0 : i32
    %2 = arith.cmpi ne, %1, %c0_i32_0 : i32
    scf.if %2 {
      %cst_8 = arith.constant 0.000000e+00 : f32
      %11 = vector.broadcast %cst_8 : f32 to vector<1x32x32xf32>
      %c0_9 = arith.constant 0 : index
      %c0_10 = arith.constant 0 : index
      %c0_11 = arith.constant 0 : index
      %12 = vector.load %arg3[%c0_9, %c0_10, %c0_11] : memref<1x32x32xf32, #tpu.memory_space<vmem>>, vector<1x32x32xf32>
      tpu.vector_store %arg3[%c0_9, %c0_10, %c0_11], %11 {strides = array<i32>} : memref<1x32x32xf32, #tpu.memory_space<vmem>>, vector<1x32x32xf32>,
    } else {
    }
    %c0 = arith.constant 0 : index
    %c0_1 = arith.constant 0 : index
    %3 = vector.load %arg2[%c0, %c0_1] : memref<16x32xf32, #tpu.memory_space<vmem>>, vector<16x32xf32>
    %cst = arith.constant dense<0.000000e+00> : vector<32x32xf32>
    %4 = tpu.matmul %3, %3, %cst {dimension_numbers = #tpu.dot_dimension_numbers<[0], [0], [1], [1], [0, 1, 1, 1], [], []>} : vector<16x32xf32>, vector<16x32xf32>, vector<32x32xf32> -> vector<32x32xf32>
    %c0_2 = arith.constant 0 : index
    %c0_3 = arith.constant 0 : index
    %c0_4 = arith.constant 0 : index
    %5 = vector.load %arg3[%c0_2, %c0_3, %c0_4] : memref<1x32x32xf32, #tpu.memory_space<vmem>>, vector<1x32x32xf32>
    %6 = vector.shape_cast %5 : vector<1x32x32xf32> to vector<32x32xf32>
    %7 = arith.addf %6, %4 : vector<32x32xf32>
    %c0_5 = arith.constant 0 : index
    %c0_6 = arith.constant 0 : index
    %c0_7 = arith.constant 0 : index
    %8 = vector.load %arg3[%c0_5, %c0_6, %c0_7] : memref<1x32x32xf32, #tpu.memory_space<vmem>>, vector<1x32x32xf32>
    %9 = vector.shape_cast %8 : vector<1x32x32xf32> to vector<32x32xf32>
    %10 = vector.shape_cast %7 : vector<32x32xf32> to vector<1x32x32xf32>
    tpu.vector_store %arg3[%c0_5, %c0_6, %c0_7], %10 {strides = array<i32>} : memref<1x32x32xf32, #tpu.memory_space<vmem>>, vector<1x32x32xf32>,
    return
  }
  func.func @transform_0(%arg0: i32, %arg1: i32) -> (i32, i32) {
    %c1_i32 = arith.constant 1 : i32
    %0 = arith.muli %arg0, %c1_i32 : i32
    %1 = arith.addi %0, %arg1 : i32
    %c0_i32 = arith.constant 0 : i32
    %c0_i32_0 = arith.constant 0 : i32
    return %1, %c0_i32 : i32, i32
  }
  func.func @transform_1(%arg0: i32, %arg1: i32) -> (i32, i32, i32) {
    %c0_i32 = arith.constant 0 : i32
    %c0_i32_0 = arith.constant 0 : i32
    %c0_i32_1 = arith.constant 0 : i32
    return %arg0, %c0_i32, %c0_i32_0 : i32, i32, i32
  }
}

</mosaic_0001>

<llo_original>
// kernel: tpu_custom_call.1
$region0: #{tpu_custom_call.1}
  #allocation0 [shape = 'u32[]', space=smem, size = 0x4, offset = 0x4, fixed_abs, tag = 'smem constant byte address 0x4 - core index']
  #allocation1 [shape = 'u32[144,128]{1,0:T(1,128)}', space=vmem, size = 0x12000, scoped, tag = 'internal scratch']
  %s0 = inlined_call_operand.hbm [shape: f32[16,32], index: 0, kind: input, shape index: {}]
  %s1 = inlined_call_operand.hbm [shape: f32[1,32,32], index: 1, kind: output, shape index: {}]
  %s2 = sld [smem:[#allocation0]]
  $region22: #{tpu_custom_call.1} parent=0
    _
  %s4 = ssub.s32 1, %s2
  %s5 = scalar_select 0, %s4, %s2
  $region1: #{tpu_custom_call.1} parent=0
    #allocation2 [shape = 'u8[8192]{0}', space=vmem, size = 0x2000, scoped, tag = 'input window, operand 0, single buffered']
    #allocation3 [shape = 's32[1]{0}', space=sflag, size = 0x4, scoped, tag = 'scoped memory for tpu_custom_call.1']
    #allocation4 [shape = 's32[1]{0}', space=sflag, size = 0x4, scoped, tag = 'scoped memory for tpu_custom_call.1']
    #allocation5 [shape = 'u8[16384]{0}', space=vmem, size = 0x4000, scoped, tag = 'output window, operand 0, single buffered']
    %6 = vsyncpa [#allocation3], 0
    %7 = vsyncpa [#allocation4], 0
    // Predicated region
    $region2: #{tpu_custom_call.1} parent=1 // pred_check
      _
    $region3: #{tpu_custom_call.1} parent=1 // pred_check_branch
      %9 = sbr.rel (0) target = $region5
    $region4: #{tpu_custom_call.1} parent=1 // pred_region
      %s10 = sadd.s32 0, 0
      %s11 = smul.u32 2, %s10
      %s13 = ssub.s32 256, 256
      %14 = vsyncadd [#allocation3], %s13
      %s15 = smul.addr %s11, 128
      %s16 = scalar_lea.hbm %s0, %s15
      %s17 = sshll.u32 [#allocation2], 4
      %s18 = int_to_ptr.vmem [resolvable:$true] %s17
      %23 = dma.hbm_to_vmem [thread:$0]  %s16, 256, %s18, [#allocation3], 128, 128, 8
    $region5: #{tpu_custom_call.1} parent=1 // pred_fallthru
      _
    // Predicated region
    $region6: #{tpu_custom_call.1} parent=1 // pred_check
      _
    $region7: #{tpu_custom_call.1} parent=1 // pred_check_branch
      %25 = sbr.rel (0) target = $region9
    $region8: #{tpu_custom_call.1} parent=1 // pred_region
      %26 = dma.done [#allocation3], 256
    $region9: #{tpu_custom_call.1} parent=1 // pred_fallthru
      _
    %s27 = sadd.s32 0, 0
    %s28 = smul.u32 2, %s27
    %p29 = scmp.eq.s32.totalorder 0, 0
    // Predicated region
    $region10: #{tpu_custom_call.1} parent=1 // pred_check
      %p30 = pneg %p29
    $region11: #{tpu_custom_call.1} parent=1 // pred_check_branch
      %32 = sbr.rel (%p30) target = $region13
    $region12: #{tpu_custom_call.1} parent=1 // pred_region
      %vm33 = vcmask 261120
      %34 = vst.msk [vmem:[#allocation5] sm:$0xff] %vm33, 0.0
      %35 = vst.msk [vmem:[#allocation5 + $0x8] sm:$0xff] %vm33, 0.0
      %36 = vst.msk [vmem:[#allocation5 + $0x10] sm:$0xff] %vm33, 0.0
      %37 = vst.msk [vmem:[#allocation5 + $0x18] sm:$0xff] %vm33, 0.0
    $region13: #{tpu_custom_call.1} parent=1 // pred_fallthru
      _
    %v38 = vld [vmem:[#allocation2] sm:$0xff]
    %v39 = vld [vmem:[#allocation2 + $0x8] sm:$0xff]
    %40 = vxpose.xlu0.b32.start [1/16] %v38, 128
    %41 = vxpose.xlu0.b32.cont [2/16] %v39, 128
    %42 = vxpose.xlu0.b32.cont [3/16] 0.0, 128
    %43 = vxpose.xlu0.b32.cont [4/16] 0.0, 128
    %44 = vxpose.xlu0.b32.cont [5/16] 0.0, 128
    %45 = vxpose.xlu0.b32.cont [6/16] 0.0, 128
    %46 = vxpose.xlu0.b32.cont [7/16] 0.0, 128
    %47 = vxpose.xlu0.b32.cont [8/16] 0.0, 128
    %48 = vxpose.xlu0.b32.cont [9/16] 0.0, 128
    %49 = vxpose.xlu0.b32.cont [10/16] 0.0, 128
    %50 = vxpose.xlu0.b32.cont [11/16] 0.0, 128
    %51 = vxpose.xlu0.b32.cont [12/16] 0.0, 128
    %52 = vxpose.xlu0.b32.cont [13/16] 0.0, 128
    %53 = vxpose.xlu0.b32.cont [14/16] 0.0, 128
    %54 = vxpose.xlu0.b32.cont [15/16] 0.0, 128
    %55 = vxpose.xlu0.b32.end [16/16] 0.0, 128
    %v56 = vpop.trf.xlu0
    %v57 = vpop.trf.xlu0
    %v58 = vpop.trf.xlu0
    %v59 = vpop.trf.xlu0
    %v60 = vpop.trf.xlu0
    %v61 = vpop.trf.xlu0
    %v62 = vpop.trf.xlu0
    %v63 = vpop.trf.xlu0
    %v64 = vpop.trf.xlu0
    %v65 = vpop.trf.xlu0
    %v66 = vpop.trf.xlu0
    %v67 = vpop.trf.xlu0
    %v68 = vpop.trf.xlu0
    %v69 = vpop.trf.xlu0
    %v70 = vpop.trf.xlu0
    %v71 = vpop.trf.xlu0
    %vm72 = vcmask 130048
    %v74 = vsel %vm72, %v56, 0
    %v77 = vsel %vm72, %v57, 0
    %v80 = vsel %vm72, %v58, 0
    %v83 = vsel %vm72, %v59, 0
    %85 = vmatprep.subr.mxu0 0.0
    %86 = vmatpush1.msra.mxu0 %v38
    %87 = vmatprep.subr.mxu0 0.0
    %88 = vmatpush1.msra.mxu0 %v39
    %89 = vmatprep.subr.mxu0 0.0
    %90 = vmatpush1.msra.mxu0 0.0
    %91 = vmatprep.subr.mxu0 0.0
    %92 = vmatpush1.msra.mxu0 0.0
    %93 = vmatprep.subr.mxu0 0.0
    %94 = vmatpush1.msra.mxu0 0.0
    %95 = vmatprep.subr.mxu0 0.0
    %96 = vmatpush1.msra.mxu0 0.0
    %97 = vmatprep.subr.mxu0 0.0
    %98 = vmatpush1.msra.mxu0 0.0
    %99 = vmatprep.subr.mxu0 0.0
    %100 = vmatpush1.msra.mxu0 0.0
    %101 = vmatprep.subr.mxu0 0.0
    %102 = vmatpush1.msra.mxu0 0.0
    %103 = vmatprep.subr.mxu0 0.0
    %104 = vmatpush1.msra.mxu0 0.0
    %105 = vmatprep.subr.mxu0 0.0
    %106 = vmatpush1.msra.mxu0 0.0
    %107 = vmatprep.subr.mxu0 0.0
    %108 = vmatpush1.msra.mxu0 0.0
    %109 = vmatprep.subr.mxu0 0.0
    %110 = vmatpush1.msra.mxu0 0.0
    %111 = vmatprep.subr.mxu0 0.0
    %112 = vmatpush1.msra.mxu0 0.0
    %113 = vmatprep.subr.mxu0 0.0
    %114 = vmatpush1.msra.mxu0 0.0
    %115 = vmatprep.subr.mxu0 0.0
    %116 = vmatpush1.msra.mxu0 0.0
    %117 = vmatprep.subr.mxu0 0.0
    %118 = vmatpush1.msra.mxu0 0.0
    %119 = vmatprep.subr.mxu0 0.0
    %120 = vmatpush1.msra.mxu0 0.0
    %121 = vmatprep.subr.mxu0 0.0
    %122 = vmatpush1.msra.mxu0 0.0
    %123 = vmatprep.subr.mxu0 0.0
    %124 = vmatpush1.msra.mxu0 0.0
    %125 = vmatprep.subr.mxu0 0.0
    %126 = vmatpush1.msra.mxu0 0.0
    %127 = vmatprep.subr.mxu0 0.0
    %128 = vmatpush1.msra.mxu0 0.0
    %129 = vmatprep.subr.mxu0 0.0
    %130 = vmatpush1.msra.mxu0 0.0
    %131 = vmatprep.subr.mxu0 0.0
    %132 = vmatpush1.msra.mxu0 0.0
    %133 = vmatprep.subr.mxu0 0.0
    %134 = vmatpush1.msra.mxu0 0.0
    %135 = vmatprep.subr.mxu0 0.0
    %136 = vmatpush1.msra.mxu0 0.0
    %137 = vmatprep.subr.mxu0 0.0
    %138 = vmatpush1.msra.mxu0 0.0
    %139 = vmatprep.subr.mxu0 0.0
    %140 = vmatpush1.msra.mxu0 0.0
    %141 = vmatprep.subr.mxu0 0.0
    %142 = vmatpush1.msra.mxu0 0.0
    %143 = vmatprep.subr.mxu0 0.0
    %144 = vmatpush1.msra.mxu0 0.0
    %145 = vmatprep.subr.mxu0 0.0
    %146 = vmatpush1.msra.mxu0 0.0
    %147 = vmatprep.subr.mxu0 0.0
    %148 = vmatpush1.msra.mxu0 0.0
    %149 = vmatprep.mubr.f32.mxu0 0.0
    %150 = vmatmul.mubr.f32.gmra.mrb[0].mxu0 %v74
    %v151 = vpop.f32.mrb[0].mxu0
    %v152 = vadd.f32 0.0, %v151
    %v153 = vpop.f32.mrb[0].mxu0
    %154 = vmatprep.mubr.f32.mxu0 0.0
    %155 = vmatmul.mubr.f32.gmra.mrb[0].mxu0 %v77
    %v156 = vpop.f32.mrb[0].mxu0
    %v157 = vadd.f32 0.0, %v156
    %v158 = vpop.f32.mrb[0].mxu0
    %159 = vmatprep.mubr.f32.mxu0 0.0
    %160 = vmatmul.mubr.f32.gmra.mrb[0].mxu0 %v80
    %v161 = vpop.f32.mrb[0].mxu0
    %v162 = vadd.f32 0.0, %v161
    %v163 = vpop.f32.mrb[0].mxu0
    %164 = vmatprep.mubr.f32.mxu0 0.0
    %165 = vmatmul.mubr.f32.gmra.mrb[0].mxu0 %v83
    %v166 = vpop.f32.mrb[0].mxu0
    %v167 = vadd.f32 0.0, %v166
    %v168 = vpop.f32.mrb[0].mxu0
    %169 = vdwg.mxu0
    %v170 = vld [vmem:[#allocation5] sm:$0xff]
    %v171 = vld [vmem:[#allocation5 + $0x8] sm:$0xff]
    %v172 = vld [vmem:[#allocation5 + $0x10] sm:$0xff]
    %v173 = vld [vmem:[#allocation5 + $0x18] sm:$0xff]
    %v174 = vadd.f32 %v170, %v152
    %v175 = vadd.f32 %v171, %v157
    %v176 = vadd.f32 %v172, %v162
    %v177 = vadd.f32 %v173, %v167
    %vm178 = vcmask 261120
    %179 = vst.msk [vmem:[#allocation5] sm:$0xff] %vm178, %v174
    %180 = vst.msk [vmem:[#allocation5 + $0x8] sm:$0xff] %vm178, %v175
    %181 = vst.msk [vmem:[#allocation5 + $0x10] sm:$0xff] %vm178, %v176
    %182 = vst.msk [vmem:[#allocation5 + $0x18] sm:$0xff] %vm178, %v177
    // Predicated region
    $region14: #{tpu_custom_call.1} parent=1 // pred_check
      _
    $region15: #{tpu_custom_call.1} parent=1 // pred_check_branch
      %184 = sbr.rel (0) target = $region17
    $region16: #{tpu_custom_call.1} parent=1 // pred_region
      %s186 = ssub.s32 512, 512
      %187 = vsyncadd [#allocation4], %s186
      %s188 = sshll.u32 [#allocation5], 4
      %s189 = int_to_ptr.vmem [resolvable:$true] %s188
      %194 = dma.vmem_to_hbm [thread:$0]  %s189, 512, %s1, [#allocation4], 128, 128, 8
    $region17: #{tpu_custom_call.1} parent=1 // pred_fallthru
      _
    // Predicated region
    $region18: #{tpu_custom_call.1} parent=1 // pred_check
      _
    $region19: #{tpu_custom_call.1} parent=1 // pred_check_branch
      %196 = sbr.rel (0) target = $region21
    $region20: #{tpu_custom_call.1} parent=1 // pred_region
      %197 = dma.done [#allocation4], 512
    $region21: #{tpu_custom_call.1} parent=1 // pred_fallthru
      _
    %198 = vsyncpa [#allocation3], 1
    %199 = vsyncpa [#allocation4], 1

</llo_original>
